<compile_context>
chip_gen: v7x
topology: tpu7x:2x2x1
jax: 0.10.0
libtpu: 0.0.40
codegen_flags: <defaults>
</compile_context>

<pallas_src>
import jax
import jax.numpy as jnp
from jax.experimental import pallas as pl
from jax.experimental.pallas import tpu as pltpu

# len(H_np): the quantum circuit initializes a 2-qubit state => len(H_np) = 2**num_qubits = 4.
NUM_QUBITS = 2
FEAT = 2 ** NUM_QUBITS      # 4
HIDDEN = 256
BATCH = 8


# ----------------------------------------------------------------------------------------
# Inference path: folded affine, 2 inputs, 1 kernel launch.
# ----------------------------------------------------------------------------------------
def folded_kernel(x_ref, wb_ref, o_ref):
    """y = x @ W_eff + b_eff; W_eff/b_eff packed as one (FEAT+1, FEAT) array."""
    x = x_ref[...]                       # (B, FEAT)
    wb = wb_ref[...]                     # (FEAT+1, FEAT): rows 0..FEAT-1 = W_eff, row FEAT = b_eff
    w = wb[:FEAT, :]
    b = wb[FEAT:FEAT + 1, :]
    y = jnp.dot(x, w, preferred_element_type=jnp.float32) + b   # single MXU pass + VPU add
    o_ref[...] = y.astype(o_ref.dtype)


def fold_params(w1, b1, w2, b2):
    """Compute once (outside the per-call path). Valid only because encoder->decoder has
    no intervening nonlinearity."""
    w_eff = jnp.dot(w1, w2, preferred_element_type=jnp.float32)        # (FEAT, FEAT)
    b_eff = jnp.dot(b1, w2, preferred_element_type=jnp.float32) + b2   # (1, FEAT)
    return jnp.concatenate([w_eff, b_eff], axis=0)                     # (FEAT+1, FEAT)


@jax.jit
def hybrid_forward(x, wb_eff):
    """Per-call forward: one grid-less pallas_call, two DMAs, everything VMEM-resident."""
    B = x.shape[0]
    return pl.pallas_call(
        folded_kernel,
        out_shape=jax.ShapeDtypeStruct((B, FEAT), jnp.float32),
        in_specs=[
            pl.BlockSpec(memory_space=pltpu.MemorySpace.VMEM),
            pl.BlockSpec(memory_space=pltpu.MemorySpace.VMEM),
        ],
        out_specs=pl.BlockSpec(memory_space=pltpu.MemorySpace.VMEM),
    )(x, wb_eff)
    # If BATCH ever grows large: add grid=(cdiv(B, TM),) over batch (TM multiple of 8),
    # constant index_map for wb_eff, dimension_semantics=("parallel",), and a lane-padded
    # (TM, 128) output block sliced in the wrapper instead of the lane-sparse (TM, 4) store.


# ----------------------------------------------------------------------------------------
# Training path (weights change every step): exact un-folded forward inside ONE kernel.
# ----------------------------------------------------------------------------------------
def train_kernel(x_ref, w1_ref, b1_ref, w2_ref, b2_ref, o_ref):
    h = jnp.dot(x_ref[...], w1_ref[...], preferred_element_type=jnp.float32) + b1_ref[...]
    y = jnp.dot(h, w2_ref[...], preferred_element_type=jnp.float32) + b2_ref[...]
    o_ref[...] = y.astype(o_ref.dtype)


@jax.jit
def hybrid_forward_train(x, w1, b1, w2, b2):
    """Single launch; the (B,HIDDEN) intermediate never leaves VMEM. Exact forward semantics
    (no fold), so no summation-order caveat. Forward only -- a custom_vjp would be needed
    to train through this call."""
    B = x.shape[0]
    vmem = pl.BlockSpec(memory_space=pltpu.MemorySpace.VMEM)
    return pl.pallas_call(
        train_kernel,
        out_shape=jax.ShapeDtypeStruct((B, FEAT), jnp.float32),
        in_specs=[vmem, vmem, vmem, vmem, vmem],
        out_specs=vmem,
    )(x, w1, b1, w2, b2)


# ----------------------------------------------------------------------------------------
def init_params(key):
    """Deterministic init mimicking nn.Linear defaults (uniform +/- 1/sqrt(fan_in))."""
    k1, k2, k3, k4 = jax.random.split(key, 4)
    bound1 = 1.0 / (FEAT ** 0.5)
    bound2 = 1.0 / (HIDDEN ** 0.5)
    # PyTorch stores (out, in); we store the transpose (in, out) for the math below.
    w1 = jax.random.uniform(k1, (FEAT, HIDDEN), jnp.float32, -bound1, bound1)
    b1 = jax.random.uniform(k2, (1, HIDDEN), jnp.float32, -bound1, bound1)
    w2 = jax.random.uniform(k3, (HIDDEN, FEAT), jnp.float32, -bound2, bound2)
    b2 = jax.random.uniform(k4, (1, FEAT), jnp.float32, -bound2, bound2)
    return w1, b1, w2, b2


if __name__ == "__main__":
    key = jax.random.PRNGKey(0)
    kx, kp = jax.random.split(key)
    x = jax.random.normal(kx, (BATCH, FEAT), jnp.float32)
    w1, b1, w2, b2 = init_params(kp)

    # Inference path: fold once, then single 2-input kernel per call.
    wb_eff = jax.block_until_ready(fold_params(w1, b1, w2, b2))
    out = jax.block_until_ready(hybrid_forward(x, wb_eff))

    # Training path: exact forward in one kernel, raw weights as inputs.
    out_train = jax.block_until_ready(hybrid_forward_train(x, w1, b1, w2, b2))

    # Reference check in plain JAX (un-folded encoder -> decoder).
    ref = (x @ w1 + b1) @ w2 + b2
    assert out.shape == (BATCH, FEAT)
    assert out_train.shape == (BATCH, FEAT)
    assert jnp.allclose(out, ref, atol=1e-4, rtol=1e-4)
    assert jnp.allclose(out_train, ref, atol=1e-5, rtol=1e-5)

    print("KERNEL_OK")
</pallas_src>

<mosaic_0001>
module attributes {stable_mosaic.version = 11 : i64} {
  func.func @folded_kernel(%arg0: memref<8x4xf32, #tpu.memory_space<vmem>>, %arg1: memref<5x4xf32, #tpu.memory_space<vmem>>, %arg2: memref<8x4xf32, #tpu.memory_space<vmem>>) attributes {dimension_semantics = [], scalar_prefetch = 0 : i64, scratch_operands = 0 : i64, tpu.core_type = #tpu.core_type<tc>} {
    %c0 = arith.constant 0 : index
    %c0_0 = arith.constant 0 : index
    %0 = vector.load %arg0[%c0, %c0_0] : memref<8x4xf32, #tpu.memory_space<vmem>>, vector<8x4xf32>
    %c0_1 = arith.constant 0 : index
    %c0_2 = arith.constant 0 : index
    %1 = vector.load %arg1[%c0_1, %c0_2] : memref<5x4xf32, #tpu.memory_space<vmem>>, vector<5x4xf32>
    %2 = vector.extract_strided_slice %1 {offsets = [0, 0], sizes = [4, 4], strides = [1, 1]} : vector<5x4xf32> to vector<4x4xf32>
    %3 = vector.extract_strided_slice %1 {offsets = [4, 0], sizes = [1, 4], strides = [1, 1]} : vector<5x4xf32> to vector<1x4xf32>
    %cst = arith.constant dense<0.000000e+00> : vector<8x4xf32>
    %4 = tpu.matmul %0, %2, %cst {dimension_numbers = #tpu.dot_dimension_numbers<[1], [0], [0], [1], [0, 0, 1, 1], [], []>} : vector<8x4xf32>, vector<4x4xf32>, vector<8x4xf32> -> vector<8x4xf32>
    %5 = vector.broadcast %3 : vector<1x4xf32> to vector<8x4xf32>
    %6 = arith.addf %4, %5 : vector<8x4xf32>
    %c0_3 = arith.constant 0 : index
    %c0_4 = arith.constant 0 : index
    %7 = vector.load %arg2[%c0_3, %c0_4] : memref<8x4xf32, #tpu.memory_space<vmem>>, vector<8x4xf32>
    tpu.vector_store %arg2[%c0_3, %c0_4], %6 {strides = array<i32>} : memref<8x4xf32, #tpu.memory_space<vmem>>, vector<8x4xf32>,
    return
  }
}

</mosaic_0001>

<llo_original>
// kernel: hybrid_forward.1
$region0: #{hybrid_forward.1}
  #allocation0 [shape = 'u32[]', space=smem, size = 0x4, offset = 0x4, fixed_abs, tag = 'smem constant byte address 0x4 - core index']
  #allocation1 [shape = 'u32[144,128]{1,0:T(1,128)}', space=vmem, size = 0x12000, scoped, tag = 'internal scratch']
  %s0 = inlined_call_operand.vmem [shape: f32[8,4], index: 0, kind: input, shape index: {}]
  %s1 = inlined_call_operand.vmem [shape: f32[5,4], index: 1, kind: input, shape index: {}]
  %s2 = inlined_call_operand.vmem [shape: f32[8,4], index: 2, kind: output, shape index: {}]
  %s3 = sld [smem:[#allocation0]]
  $region18: #{hybrid_forward.1} parent=0
    _
  %s5 = ssub.s32 1, %s3
  %s6 = scalar_select 0, %s5, %s3
  // Predicated region
  $region2: #{hybrid_forward.1} parent=0 // pred_check
    _
  $region3: #{hybrid_forward.1} parent=0 // pred_check_branch
    %8 = sbr.rel (0) target = $region5
  $region4: #{hybrid_forward.1} parent=0 // pred_region
    _
  $region5: #{hybrid_forward.1} parent=0 // pred_fallthru
    _
  // Predicated region
  $region6: #{hybrid_forward.1} parent=0 // pred_check
    _
  $region7: #{hybrid_forward.1} parent=0 // pred_check_branch
    %10 = sbr.rel (0) target = $region9
  $region8: #{hybrid_forward.1} parent=0 // pred_region
    _
  $region9: #{hybrid_forward.1} parent=0 // pred_fallthru
    _
  %v11 = vld [vmem:[%s0] sm:$0xff]
  %v12 = vld [vmem:[%s1] sm:$0x1f]
  %v13 = vlaneseq
  %v14 = vshrl.u32 %v13, 7
  %v15 = vsub.s32 4, %v14
  %v16 = vrot.slane %v12, %v15
  %vm17 = vcmask 31744
  %v19 = vsel %vm17, %v11, 0
  %vm21 = vcmask 1043456
  %v23 = vsel %vm21, %v12, 0
  %25 = vmatprep.subr.mxu0 0.0
  %26 = vmatpush1.msra.mxu0 %v23
  %27 = vmatprep.subr.mxu0 0.0
  %28 = vmatpush1.msra.mxu0 0.0
  %29 = vmatprep.subr.mxu0 0.0
  %30 = vmatpush1.msra.mxu0 0.0
  %31 = vmatprep.subr.mxu0 0.0
  %32 = vmatpush1.msra.mxu0 0.0
  %33 = vmatprep.subr.mxu0 0.0
  %34 = vmatpush1.msra.mxu0 0.0
  %35 = vmatprep.subr.mxu0 0.0
  %36 = vmatpush1.msra.mxu0 0.0
  %37 = vmatprep.subr.mxu0 0.0
  %38 = vmatpush1.msra.mxu0 0.0
  %39 = vmatprep.subr.mxu0 0.0
  %40 = vmatpush1.msra.mxu0 0.0
  %41 = vmatprep.subr.mxu0 0.0
  %42 = vmatpush1.msra.mxu0 0.0
  %43 = vmatprep.subr.mxu0 0.0
  %44 = vmatpush1.msra.mxu0 0.0
  %45 = vmatprep.subr.mxu0 0.0
  %46 = vmatpush1.msra.mxu0 0.0
  %47 = vmatprep.subr.mxu0 0.0
  %48 = vmatpush1.msra.mxu0 0.0
  %49 = vmatprep.subr.mxu0 0.0
  %50 = vmatpush1.msra.mxu0 0.0
  %51 = vmatprep.subr.mxu0 0.0
  %52 = vmatpush1.msra.mxu0 0.0
  %53 = vmatprep.subr.mxu0 0.0
  %54 = vmatpush1.msra.mxu0 0.0
  %55 = vmatprep.subr.mxu0 0.0
  %56 = vmatpush1.msra.mxu0 0.0
  %57 = vmatprep.subr.mxu0 0.0
  %58 = vmatpush1.msra.mxu0 0.0
  %59 = vmatprep.subr.mxu0 0.0
  %60 = vmatpush1.msra.mxu0 0.0
  %61 = vmatprep.subr.mxu0 0.0
  %62 = vmatpush1.msra.mxu0 0.0
  %63 = vmatprep.subr.mxu0 0.0
  %64 = vmatpush1.msra.mxu0 0.0
  %65 = vmatprep.subr.mxu0 0.0
  %66 = vmatpush1.msra.mxu0 0.0
  %67 = vmatprep.subr.mxu0 0.0
  %68 = vmatpush1.msra.mxu0 0.0
  %69 = vmatprep.subr.mxu0 0.0
  %70 = vmatpush1.msra.mxu0 0.0
  %71 = vmatprep.subr.mxu0 0.0
  %72 = vmatpush1.msra.mxu0 0.0
  %73 = vmatprep.subr.mxu0 0.0
  %74 = vmatpush1.msra.mxu0 0.0
  %75 = vmatprep.subr.mxu0 0.0
  %76 = vmatpush1.msra.mxu0 0.0
  %77 = vmatprep.subr.mxu0 0.0
  %78 = vmatpush1.msra.mxu0 0.0
  %79 = vmatprep.subr.mxu0 0.0
  %80 = vmatpush1.msra.mxu0 0.0
  %81 = vmatprep.subr.mxu0 0.0
  %82 = vmatpush1.msra.mxu0 0.0
  %83 = vmatprep.subr.mxu0 0.0
  %84 = vmatpush1.msra.mxu0 0.0
  %85 = vmatprep.subr.mxu0 0.0
  %86 = vmatpush1.msra.mxu0 0.0
  %87 = vmatprep.subr.mxu0 0.0
  %88 = vmatpush1.msra.mxu0 0.0
  %89 = vmatprep.mubr.f32.mxu0 0.0
  %90 = vmatmul.mubr.f32.gmra.mrb[0].mxu0 %v19
  %v91 = vpop.f32.mrb[0].mxu0
  %v92 = vadd.f32 %v16, %v91
  %v93 = vpop.f32.mrb[0].mxu0
  %94 = vdwg.mxu0
  %95 = vst.msk [vmem:[%s2] sm:$0xff] %vm17, %v92
  // Predicated region
  $region10: #{hybrid_forward.1} parent=0 // pred_check
    _
  $region11: #{hybrid_forward.1} parent=0 // pred_check_branch
    %97 = sbr.rel (0) target = $region13
  $region12: #{hybrid_forward.1} parent=0 // pred_region
    _
  $region13: #{hybrid_forward.1} parent=0 // pred_fallthru
    _
  // Predicated region
  $region14: #{hybrid_forward.1} parent=0 // pred_check
    _
  $region15: #{hybrid_forward.1} parent=0 // pred_check_branch
    %99 = sbr.rel (0) target = $region17
  $region16: #{hybrid_forward.1} parent=0 // pred_region
    _
  $region17: #{hybrid_forward.1} parent=0 // pred_fallthru
    _

</llo_original>
